<compile_context>
chip_gen: v5e
topology: v5e:2x2
jax: 0.10.0
libtpu: 0.0.40
codegen_flags: <defaults>
</compile_context>

<pallas_src>
import jax
import jax.numpy as jnp
from jax.experimental import pallas as pl
from jax.experimental.pallas import tpu as pltpu


def _round_up(n, m):
    return ((n + m - 1) // m) * m


def _net_kernel(x_ref, w1_ref, b1_ref, w2_ref, b2_ref, w3_ref, b3_ref, out_ref):
    # x_ref: (TB, 1) — the pre-sliced input column.
    x = x_ref[...]

    # Layer 1 + ReLU as a VPU outer-product broadcast (no MXU needed for K=1):
    #   (TB, 1) * (1, Hp) + (1, Hp) -> (TB, Hp)
    h1 = jnp.maximum(x * w1_ref[...] + b1_ref[...], 0.0)

    # Layer 2 + ReLU : (TB, Hp) @ (Hp, Hp) + (1, Hp)   (lane-dense MXU matmul)
    h2 = jnp.dot(h1, w2_ref[...], preferred_element_type=jnp.float32) + b2_ref[...]
    h2 = jnp.maximum(h2, 0.0)

    # Layer 3 (no activation) : (TB, Hp) @ (Hp, Op) + (1, Op)
    out = jnp.dot(h2, w3_ref[...], preferred_element_type=jnp.float32) + b3_ref[...]

    # Final elementwise product with the sliced input column; lane-dense store.
    out_ref[...] = (out * x).astype(out_ref.dtype)


def init_params(key, n_input, n_hidden, n_output):
    """Deterministic init mimicking torch.nn.Linear default (uniform +-1/sqrt(fan_in)).
    Weights stored pre-transposed as (in, out); biases as (1, out) rows."""
    assert n_input == 1, "forward slices the input to a single column -> n_input must be 1"
    ks = jax.random.split(key, 6)

    def uniform(k, shape, fan_in):
        bound = 1.0 / jnp.sqrt(jnp.float32(fan_in))
        return jax.random.uniform(k, shape, jnp.float32, -bound, bound)

    w1t = uniform(ks[0], (n_input, n_hidden), n_input)
    b1 = uniform(ks[1], (1, n_hidden), n_input)
    w2t = uniform(ks[2], (n_hidden, n_hidden), n_hidden)
    b2 = uniform(ks[3], (1, n_hidden), n_hidden)
    w3t = uniform(ks[4], (n_hidden, n_output), n_hidden)
    b3 = uniform(ks[5], (1, n_output), n_hidden)
    return dict(w1t=w1t, b1=b1, w2t=w2t, b2=b2, w3t=w3t, b3=b3)


def pad_params(params):
    """Zero-pad hidden/output dims up to multiples of 128 lanes (done once).
    Zero padding preserves the forward exactly: padded hidden units are
    relu(0) = 0 and padded output columns are 0 (sliced away in the wrapper)."""
    H = params["w2t"].shape[0]
    O = params["w3t"].shape[1]
    Hp = _round_up(H, 128)
    Op = _round_up(O, 128)

    def pad2(a, rows, cols):
        return jnp.pad(a, ((0, rows - a.shape[0]), (0, cols - a.shape[1])))

    return dict(
        w1t=pad2(params["w1t"], 1, Hp),
        b1=pad2(params["b1"], 1, Hp),
        w2t=pad2(params["w2t"], Hp, Hp),
        b2=pad2(params["b2"], 1, Hp),
        w3t=pad2(params["w3t"], Hp, Op),
        b3=pad2(params["b3"], 1, Op),
    ), H, O


def net_forward(data, padded_params, n_output):
    """data: (B, D) float32 with D >= 2. padded_params: output of pad_params()."""
    B = data.shape[0]
    Hp = padded_params["w2t"].shape[0]
    Op = padded_params["w3t"].shape[1]

    # Slice the single used feature column in the wrapper (avoids DMAing the
    # unused D-1 columns) and pad the batch to a multiple of the tile size.
    x = data[:, 1:2]
    TB = 512 if B >= 512 else _round_up(B, 8)
    B_pad = _round_up(B, TB)
    if B_pad != B:
        x = jnp.pad(x, ((0, B_pad - B), (0, 0)))

    out_padded = pl.pallas_call(
        _net_kernel,
        out_shape=jax.ShapeDtypeStruct((B_pad, Op), jnp.float32),
        grid_spec=pltpu.PrefetchScalarGridSpec(
            num_scalar_prefetch=0,
            grid=(B_pad // TB,),
            in_specs=[
                pl.BlockSpec((TB, 1), lambda i: (i, 0)),     # x batch tile
                pl.BlockSpec((1, Hp), lambda i: (0, 0)),     # w1 row (resident)
                pl.BlockSpec((1, Hp), lambda i: (0, 0)),     # b1
                pl.BlockSpec((Hp, Hp), lambda i: (0, 0)),    # w2t
                pl.BlockSpec((1, Hp), lambda i: (0, 0)),     # b2
                pl.BlockSpec((Hp, Op), lambda i: (0, 0)),    # w3t
                pl.BlockSpec((1, Op), lambda i: (0, 0)),     # b3
            ],
            out_specs=pl.BlockSpec((TB, Op), lambda i: (i, 0)),
        ),
        compiler_params=pltpu.CompilerParams(
            dimension_semantics=("parallel",),
        ),
    )(
        x,
        padded_params["w1t"], padded_params["b1"],
        padded_params["w2t"], padded_params["b2"],
        padded_params["w3t"], padded_params["b3"],
    )

    # Strip batch padding and lane padding back to the logical shape.
    return out_padded[:B, :n_output]


def reference_forward(data, params):
    """Pure-JAX reference of the PyTorch forward, for correctness checking."""
    x = data[:, 1:2]
    h1 = jnp.maximum(x @ params["w1t"] + params["b1"], 0.0)
    h2 = jnp.maximum(h1 @ params["w2t"] + params["b2"], 0.0)
    out = h2 @ params["w3t"] + params["b3"]
    return out * x


if __name__ == "__main__":
    # Module hyperparameters: n_input must be 1 (forward slices to one column).
    n_input, n_hidden, n_output = 1, 32, 4
    B, D = 8, 4  # input `data` has D >= 2 columns; column 1 is used

    key = jax.random.PRNGKey(0)
    k_data, k_params = jax.random.split(key)
    data = jax.random.normal(k_data, (B, D), dtype=jnp.float32)
    params = init_params(k_params, n_input, n_hidden, n_output)
    padded_params, _, _ = pad_params(params)

    out = net_forward(data, padded_params, n_output)
    out = jax.block_until_ready(out)

    ref = reference_forward(data, params)
    assert out.shape == (B, n_output), out.shape
    assert jnp.allclose(out, ref, atol=1e-5, rtol=1e-5), "mismatch vs reference"

    print("KERNEL_OK")
</pallas_src>

<mosaic_0001>
module attributes {stable_mosaic.version = 11 : i64} {
  func.func @_net_kernel(%arg0: i32, %arg1: memref<8x1xf32, #tpu.memory_space<vmem>>, %arg2: memref<1x128xf32, #tpu.memory_space<vmem>>, %arg3: memref<1x128xf32, #tpu.memory_space<vmem>>, %arg4: memref<128x128xf32, #tpu.memory_space<vmem>>, %arg5: memref<1x128xf32, #tpu.memory_space<vmem>>, %arg6: memref<128x128xf32, #tpu.memory_space<vmem>>, %arg7: memref<1x128xf32, #tpu.memory_space<vmem>>, %arg8: memref<8x128xf32, #tpu.memory_space<vmem>>) attributes {dimension_semantics = [#tpu.dimension_semantics<parallel>], iteration_bounds = array<i64: 1>, scalar_prefetch = 0 : i64, scratch_operands = 0 : i64, tpu.core_type = #tpu.core_type<tc>, window_params = [{transform_indices = @transform_0, window_bounds = array<i64: 8, 1>}, {pipeline_mode = #tpu.pipeline_mode<synchronous>, transform_indices = @transform_1, window_bounds = array<i64: 1, 128>}, {pipeline_mode = #tpu.pipeline_mode<synchronous>, transform_indices = @transform_2, window_bounds = array<i64: 1, 128>}, {pipeline_mode = #tpu.pipeline_mode<synchronous>, transform_indices = @transform_3, window_bounds = array<i64: 128, 128>}, {pipeline_mode = #tpu.pipeline_mode<synchronous>, transform_indices = @transform_4, window_bounds = array<i64: 1, 128>}, {pipeline_mode = #tpu.pipeline_mode<synchronous>, transform_indices = @transform_5, window_bounds = array<i64: 128, 128>}, {pipeline_mode = #tpu.pipeline_mode<synchronous>, transform_indices = @transform_6, window_bounds = array<i64: 1, 128>}, {transform_indices = @transform_7, window_bounds = array<i64: 8, 128>}]} {
    %c0 = arith.constant 0 : index
    %c0_0 = arith.constant 0 : index
    %0 = vector.load %arg1[%c0, %c0_0] : memref<8x1xf32, #tpu.memory_space<vmem>>, vector<8x1xf32>
    %c0_1 = arith.constant 0 : index
    %c0_2 = arith.constant 0 : index
    %1 = vector.load %arg2[%c0_1, %c0_2] : memref<1x128xf32, #tpu.memory_space<vmem>>, vector<1x128xf32>
    %2 = vector.broadcast %0 : vector<8x1xf32> to vector<8x128xf32>
    %3 = vector.broadcast %1 : vector<1x128xf32> to vector<8x128xf32>
    %4 = arith.mulf %2, %3 : vector<8x128xf32>
    %c0_3 = arith.constant 0 : index
    %c0_4 = arith.constant 0 : index
    %5 = vector.load %arg3[%c0_3, %c0_4] : memref<1x128xf32, #tpu.memory_space<vmem>>, vector<1x128xf32>
    %6 = vector.broadcast %5 : vector<1x128xf32> to vector<8x128xf32>
    %7 = arith.addf %4, %6 : vector<8x128xf32>
    %cst = arith.constant 0.000000e+00 : f32
    %8 = vector.broadcast %cst : f32 to vector<8x128xf32>
    %9 = arith.maximumf %7, %8 : vector<8x128xf32>
    %c0_5 = arith.constant 0 : index
    %c0_6 = arith.constant 0 : index
    %10 = vector.load %arg4[%c0_5, %c0_6] : memref<128x128xf32, #tpu.memory_space<vmem>>, vector<128x128xf32>
    %cst_7 = arith.constant dense<0.000000e+00> : vector<8x128xf32>
    %11 = tpu.matmul %9, %10, %cst_7 {dimension_numbers = #tpu.dot_dimension_numbers<[1], [0], [0], [1], [0, 0, 1, 1], [], []>} : vector<8x128xf32>, vector<128x128xf32>, vector<8x128xf32> -> vector<8x128xf32>
    %c0_8 = arith.constant 0 : index
    %c0_9 = arith.constant 0 : index
    %12 = vector.load %arg5[%c0_8, %c0_9] : memref<1x128xf32, #tpu.memory_space<vmem>>, vector<1x128xf32>
    %13 = vector.broadcast %12 : vector<1x128xf32> to vector<8x128xf32>
    %14 = arith.addf %11, %13 : vector<8x128xf32>
    %cst_10 = arith.constant 0.000000e+00 : f32
    %15 = vector.broadcast %cst_10 : f32 to vector<8x128xf32>
    %16 = arith.maximumf %14, %15 : vector<8x128xf32>
    %c0_11 = arith.constant 0 : index
    %c0_12 = arith.constant 0 : index
    %17 = vector.load %arg6[%c0_11, %c0_12] : memref<128x128xf32, #tpu.memory_space<vmem>>, vector<128x128xf32>
    %cst_13 = arith.constant dense<0.000000e+00> : vector<8x128xf32>
    %18 = tpu.matmul %16, %17, %cst_13 {dimension_numbers = #tpu.dot_dimension_numbers<[1], [0], [0], [1], [0, 0, 1, 1], [], []>} : vector<8x128xf32>, vector<128x128xf32>, vector<8x128xf32> -> vector<8x128xf32>
    %c0_14 = arith.constant 0 : index
    %c0_15 = arith.constant 0 : index
    %19 = vector.load %arg7[%c0_14, %c0_15] : memref<1x128xf32, #tpu.memory_space<vmem>>, vector<1x128xf32>
    %20 = vector.broadcast %19 : vector<1x128xf32> to vector<8x128xf32>
    %21 = arith.addf %18, %20 : vector<8x128xf32>
    %22 = vector.broadcast %0 : vector<8x1xf32> to vector<8x128xf32>
    %23 = arith.mulf %21, %22 : vector<8x128xf32>
    %c0_16 = arith.constant 0 : index
    %c0_17 = arith.constant 0 : index
    %24 = vector.load %arg8[%c0_16, %c0_17] : memref<8x128xf32, #tpu.memory_space<vmem>>, vector<8x128xf32>
    tpu.vector_store %arg8[%c0_16, %c0_17], %23 {strides = array<i32>} : memref<8x128xf32, #tpu.memory_space<vmem>>, vector<8x128xf32>,
    return
  }
  func.func @transform_0(%arg0: i32) -> (i32, i32) {
    %c0_i32 = arith.constant 0 : i32
    %c0_i32_0 = arith.constant 0 : i32
    return %arg0, %c0_i32 : i32, i32
  }
  func.func @transform_1(%arg0: i32) -> (i32, i32) {
    %c0_i32 = arith.constant 0 : i32
    %c0_i32_0 = arith.constant 0 : i32
    %c0_i32_1 = arith.constant 0 : i32
    return %c0_i32, %c0_i32_0 : i32, i32
  }
  func.func @transform_2(%arg0: i32) -> (i32, i32) {
    %c0_i32 = arith.constant 0 : i32
    %c0_i32_0 = arith.constant 0 : i32
    %c0_i32_1 = arith.constant 0 : i32
    return %c0_i32, %c0_i32_0 : i32, i32
  }
  func.func @transform_3(%arg0: i32) -> (i32, i32) {
    %c0_i32 = arith.constant 0 : i32
    %c0_i32_0 = arith.constant 0 : i32
    %c0_i32_1 = arith.constant 0 : i32
    return %c0_i32, %c0_i32_0 : i32, i32
  }
  func.func @transform_4(%arg0: i32) -> (i32, i32) {
    %c0_i32 = arith.constant 0 : i32
    %c0_i32_0 = arith.constant 0 : i32
    %c0_i32_1 = arith.constant 0 : i32
    return %c0_i32, %c0_i32_0 : i32, i32
  }
  func.func @transform_5(%arg0: i32) -> (i32, i32) {
    %c0_i32 = arith.constant 0 : i32
    %c0_i32_0 = arith.constant 0 : i32
    %c0_i32_1 = arith.constant 0 : i32
    return %c0_i32, %c0_i32_0 : i32, i32
  }
  func.func @transform_6(%arg0: i32) -> (i32, i32) {
    %c0_i32 = arith.constant 0 : i32
    %c0_i32_0 = arith.constant 0 : i32
    %c0_i32_1 = arith.constant 0 : i32
    return %c0_i32, %c0_i32_0 : i32, i32
  }
  func.func @transform_7(%arg0: i32) -> (i32, i32) {
    %c0_i32 = arith.constant 0 : i32
    %c0_i32_0 = arith.constant 0 : i32
    return %arg0, %c0_i32 : i32, i32
  }
}

</mosaic_0001>

<llo_original>
// kernel: tpu_custom_call.1
$region0: #{tpu_custom_call.1}
  #allocation0 [shape = 'u32[]', space=smem, size = 0x4, offset = 0x4, fixed_abs, tag = 'smem constant byte address 0x4 - core index']
  #allocation1 [shape = 'u32[72,128]{1,0:T(1,128)}', space=vmem, size = 0x9000, scoped, tag = 'internal scratch']
  %s0 = inlined_call_operand.vmem [shape: f32[8,1], index: 0, kind: input, shape index: {}]
  %s1 = inlined_call_operand.vmem [shape: f32[1,128], index: 1, kind: input, shape index: {}]
  %s2 = inlined_call_operand.vmem [shape: f32[1,128], index: 2, kind: input, shape index: {}]
  %s3 = inlined_call_operand.hbm [shape: f32[128,128], index: 3, kind: input, shape index: {}]
  %s4 = inlined_call_operand.vmem [shape: f32[1,128], index: 4, kind: input, shape index: {}]
  %s5 = inlined_call_operand.hbm [shape: f32[128,128], index: 5, kind: input, shape index: {}]
  %s6 = inlined_call_operand.vmem [shape: f32[1,128], index: 6, kind: input, shape index: {}]
  %s7 = inlined_call_operand.hbm [shape: f32[8,128], index: 7, kind: output, shape index: {}]
  %s8 = sld [smem:[#allocation0]]
  $region46: #{tpu_custom_call.1} parent=0
    _
  %s10 = ssub.s32 1, %s8
  %s11 = scalar_select 0, %s10, %s8
  $region1: #{tpu_custom_call.1} parent=0
    #allocation2 [shape = 'u8[65536]{0}', space=vmem, size = 0x10000, scoped, tag = 'input window, operand 3, single buffered']
    #allocation3 [shape = 's32[1]{0}', space=sflag, size = 0x4, scoped, tag = 'scoped memory for tpu_custom_call.1']
    #allocation4 [shape = 's32[1]{0}', space=sflag, size = 0x4, scoped, tag = 'scoped memory for tpu_custom_call.1']
    #allocation5 [shape = 'u8[65536]{0}', space=vmem, size = 0x10000, scoped, tag = 'input window, operand 5, single buffered']
    #allocation6 [shape = 's32[1]{0}', space=sflag, size = 0x4, scoped, tag = 'scoped memory for tpu_custom_call.1']
    #allocation7 [shape = 'u8[4096]{0}', space=vmem, size = 0x1000, scoped, tag = 'output window, operand 0, single buffered']
    %12 = vsyncpa [#allocation3], 0
    %13 = vsyncpa [#allocation6], 0
    %14 = vsyncpa [#allocation4], 0
    // Predicated region
    $region2: #{tpu_custom_call.1} parent=1 // pred_check
      _
    $region3: #{tpu_custom_call.1} parent=1 // pred_check_branch
      %16 = sbr.rel (0) target = $region5
    $region4: #{tpu_custom_call.1} parent=1 // pred_region
      _
    $region5: #{tpu_custom_call.1} parent=1 // pred_fallthru
      _
    // Predicated region
    $region6: #{tpu_custom_call.1} parent=1 // pred_check
      _
    $region7: #{tpu_custom_call.1} parent=1 // pred_check_branch
      %18 = sbr.rel (0) target = $region9
    $region8: #{tpu_custom_call.1} parent=1 // pred_region
      _
    $region9: #{tpu_custom_call.1} parent=1 // pred_fallthru
      _
    // Predicated region
    $region10: #{tpu_custom_call.1} parent=1 // pred_check
      _
    $region11: #{tpu_custom_call.1} parent=1 // pred_check_branch
      %20 = sbr.rel (0) target = $region13
    $region12: #{tpu_custom_call.1} parent=1 // pred_region
      _
    $region13: #{tpu_custom_call.1} parent=1 // pred_fallthru
      _
    // Predicated region
    $region14: #{tpu_custom_call.1} parent=1 // pred_check
      _
    $region15: #{tpu_custom_call.1} parent=1 // pred_check_branch
      %22 = sbr.rel (0) target = $region17
    $region16: #{tpu_custom_call.1} parent=1 // pred_region
      %24 = vsyncadd [#allocation3], 0
      %s25 = sshll.u32 %s3, 4
      %s26 = int_to_ptr.hbm [resolvable:$true] %s25
      %s27 = sshll.u32 [#allocation2], 4
      %s28 = int_to_ptr.vmem [resolvable:$true] %s27
      %33 = dma.hbm_to_vmem [thread:$0]  %s26, 2048, %s28, [#allocation3], 128, 128, 8
    $region17: #{tpu_custom_call.1} parent=1 // pred_fallthru
      _
    // Predicated region
    $region18: #{tpu_custom_call.1} parent=1 // pred_check
      _
    $region19: #{tpu_custom_call.1} parent=1 // pred_check_branch
      %35 = sbr.rel (0) target = $region21
    $region20: #{tpu_custom_call.1} parent=1 // pred_region
      _
    $region21: #{tpu_custom_call.1} parent=1 // pred_fallthru
      _
    // Predicated region
    $region22: #{tpu_custom_call.1} parent=1 // pred_check
      _
    $region23: #{tpu_custom_call.1} parent=1 // pred_check_branch
      %37 = sbr.rel (0) target = $region25
    $region24: #{tpu_custom_call.1} parent=1 // pred_region
      %39 = vsyncadd [#allocation6], 0
      %s40 = sshll.u32 %s5, 4
      %s41 = int_to_ptr.hbm [resolvable:$true] %s40
      %s42 = sshll.u32 [#allocation5], 4
      %s43 = int_to_ptr.vmem [resolvable:$true] %s42
      %48 = dma.hbm_to_vmem [thread:$0]  %s41, 2048, %s43, [#allocation6], 128, 128, 8
    $region25: #{tpu_custom_call.1} parent=1 // pred_fallthru
      _
    // Predicated region
    $region26: #{tpu_custom_call.1} parent=1 // pred_check
      _
    $region27: #{tpu_custom_call.1} parent=1 // pred_check_branch
      %50 = sbr.rel (0) target = $region29
    $region28: #{tpu_custom_call.1} parent=1 // pred_region
      _
    $region29: #{tpu_custom_call.1} parent=1 // pred_fallthru
      _
    // Predicated region
    $region30: #{tpu_custom_call.1} parent=1 // pred_check
      _
    $region31: #{tpu_custom_call.1} parent=1 // pred_check_branch
      %52 = sbr.rel (0) target = $region33
    $region32: #{tpu_custom_call.1} parent=1 // pred_region
      %54 = dma.done [#allocation3], 2048
    $region33: #{tpu_custom_call.1} parent=1 // pred_fallthru
      _
    // Predicated region
    $region34: #{tpu_custom_call.1} parent=1 // pred_check
      _
    $region35: #{tpu_custom_call.1} parent=1 // pred_check_branch
      %56 = sbr.rel (0) target = $region37
    $region36: #{tpu_custom_call.1} parent=1 // pred_region
      %58 = dma.done [#allocation6], 2048
    $region37: #{tpu_custom_call.1} parent=1 // pred_fallthru
      _
    %v59 = vld [vmem:[%s0] sm:$0xff]
    %v60 = vld [vmem:[%s1] sm:$0x1]
    %62 = vset.pattern.permute.xlu0 0
    %63 = vperm.xlu0 %62, %v59
    %v64 = vpop.permute.xlu0 %63
    %v67 = vperm.slane %v60, 0
    %v69 = vmul.f32 %v64, %v67
    %v70 = vld [vmem:[%s2] sm:$0x1]
    %v72 = vperm.slane %v70, 0
    %v74 = vadd.f32 %v69, %v72
    %v75 = vmax.f32 %v74, 0.0
    %v76 = vld [vmem:[#allocation2] sm:$0xff]
    %v77 = vld [vmem:[#allocation2 + $0x8] sm:$0xff]
    %v78 = vld [vmem:[#allocation2 + $0x10] sm:$0xff]
    %v79 = vld [vmem:[#allocation2 + $0x18] sm:$0xff]
    %v80 = vld [vmem:[#allocation2 + $0x20] sm:$0xff]
    %v81 = vld [vmem:[#allocation2 + $0x28] sm:$0xff]
    %v82 = vld [vmem:[#allocation2 + $0x30] sm:$0xff]
    %v83 = vld [vmem:[#allocation2 + $0x38] sm:$0xff]
    %v84 = vld [vmem:[#allocation2 + $0x40] sm:$0xff]
    %v85 = vld [vmem:[#allocation2 + $0x48] sm:$0xff]
    %v86 = vld [vmem:[#allocation2 + $0x50] sm:$0xff]
    %v87 = vld [vmem:[#allocation2 + $0x58] sm:$0xff]
    %v88 = vld [vmem:[#allocation2 + $0x60] sm:$0xff]
    %v89 = vld [vmem:[#allocation2 + $0x68] sm:$0xff]
    %v90 = vld [vmem:[#allocation2 + $0x70] sm:$0xff]
    %v91 = vld [vmem:[#allocation2 + $0x78] sm:$0xff]
    %v92 = vld [vmem:[%s4] sm:$0x1]
    %v94 = vperm.slane %v92, 0
    %96 = vmatpush.msra.mxu0 %v91
    %97 = vmatpush.msra.mxu0 %v90
    %98 = vmatpush.msra.mxu0 %v89
    %99 = vmatpush.msra.mxu0 %v88
    %100 = vmatpush.msra.mxu0 %v87
    %101 = vmatpush.msra.mxu0 %v86
    %102 = vmatpush.msra.mxu0 %v85
    %103 = vmatpush.msra.mxu0 %v84
    %104 = vmatpush.msra.mxu0 %v83
    %105 = vmatpush.msra.mxu0 %v82
    %106 = vmatpush.msra.mxu0 %v81
    %107 = vmatpush.msra.mxu0 %v80
    %108 = vmatpush.msra.mxu0 %v79
    %109 = vmatpush.msra.mxu0 %v78
    %110 = vmatpush.msra.mxu0 %v77
    %111 = vmatpush.msra.mxu0 %v76
    %112 = vmatmul.f32.gmra.mxu0 %v75
    %v113 = vpop.f32.mrf.mxu0
    %v114 = vadd.f32 %v94, %v113
    %115 = vdwg.mxu0
    %v116 = vmax.f32 %v114, 0.0
    %v117 = vld [vmem:[#allocation5] sm:$0xff]
    %v118 = vld [vmem:[#allocation5 + $0x8] sm:$0xff]
    %v119 = vld [vmem:[#allocation5 + $0x10] sm:$0xff]
    %v120 = vld [vmem:[#allocation5 + $0x18] sm:$0xff]
    %v121 = vld [vmem:[#allocation5 + $0x20] sm:$0xff]
    %v122 = vld [vmem:[#allocation5 + $0x28] sm:$0xff]
    %v123 = vld [vmem:[#allocation5 + $0x30] sm:$0xff]
    %v124 = vld [vmem:[#allocation5 + $0x38] sm:$0xff]
    %v125 = vld [vmem:[#allocation5 + $0x40] sm:$0xff]
    %v126 = vld [vmem:[#allocation5 + $0x48] sm:$0xff]
    %v127 = vld [vmem:[#allocation5 + $0x50] sm:$0xff]
    %v128 = vld [vmem:[#allocation5 + $0x58] sm:$0xff]
    %v129 = vld [vmem:[#allocation5 + $0x60] sm:$0xff]
    %v130 = vld [vmem:[#allocation5 + $0x68] sm:$0xff]
    %v131 = vld [vmem:[#allocation5 + $0x70] sm:$0xff]
    %v132 = vld [vmem:[#allocation5 + $0x78] sm:$0xff]
    %v133 = vld [vmem:[%s6] sm:$0x1]
    %v135 = vperm.slane %v133, 0
    %137 = vmatpush.msra.mxu0 %v132
    %138 = vmatpush.msra.mxu0 %v131
    %139 = vmatpush.msra.mxu0 %v130
    %140 = vmatpush.msra.mxu0 %v129
    %141 = vmatpush.msra.mxu0 %v128
    %142 = vmatpush.msra.mxu0 %v127
    %143 = vmatpush.msra.mxu0 %v126
    %144 = vmatpush.msra.mxu0 %v125
    %145 = vmatpush.msra.mxu0 %v124
    %146 = vmatpush.msra.mxu0 %v123
    %147 = vmatpush.msra.mxu0 %v122
    %148 = vmatpush.msra.mxu0 %v121
    %149 = vmatpush.msra.mxu0 %v120
    %150 = vmatpush.msra.mxu0 %v119
    %151 = vmatpush.msra.mxu0 %v118
    %152 = vmatpush.msra.mxu0 %v117
    %153 = vmatmul.f32.gmra.mxu0 %v116
    %v154 = vpop.f32.mrf.mxu0
    %v155 = vadd.f32 %v135, %v154
    %156 = vdwg.mxu0
    %v157 = vmul.f32 %v155, %v64
    %158 = vst [vmem:[#allocation7] sm:$0xff] %v157
    // Predicated region
    $region38: #{tpu_custom_call.1} parent=1 // pred_check
      _
    $region39: #{tpu_custom_call.1} parent=1 // pred_check_branch
      %160 = sbr.rel (0) target = $region41
    $region40: #{tpu_custom_call.1} parent=1 // pred_region
      %162 = vsyncadd [#allocation4], 0
      %s164 = sshll.u32 [#allocation7], 4
      %s165 = int_to_ptr.vmem [resolvable:$true] %s164
      %s166 = sshll.u32 %s7, 4
      %s167 = int_to_ptr.hbm [resolvable:$true] %s166
      %169 = dma.vmem_to_hbm [thread:$0]  %s165, 128, %s167, [#allocation4]
    $region41: #{tpu_custom_call.1} parent=1 // pred_fallthru
      _
    // Predicated region
    $region42: #{tpu_custom_call.1} parent=1 // pred_check
      _
    $region43: #{tpu_custom_call.1} parent=1 // pred_check_branch
      %171 = sbr.rel (0) target = $region45
    $region44: #{tpu_custom_call.1} parent=1 // pred_region
      %173 = dma.done [#allocation4], 128
    $region45: #{tpu_custom_call.1} parent=1 // pred_fallthru
      _
    %174 = vsyncpa [#allocation3], 1
    %175 = vsyncpa [#allocation6], 1
    %176 = vsyncpa [#allocation4], 1

</llo_original>
